<compile_context>
chip_gen: v6e
topology: v6e:2x2x1
jax: 0.10.0
libtpu: 0.0.40
codegen_flags: <defaults>
</compile_context>

<pallas_src>
import jax
import jax.numpy as jnp
from jax.experimental import pallas as pl
from jax.experimental.pallas import tpu as pltpu

N_CLASSES = 7
LANE = 128   # lane-dense width for feat / logits slab
TM = 128     # batch rows per grid step


# ------------------------------ Pallas kernel -------------------------------


def _fused_multimodal_kernel(ws_ref, wf_ref, wt_ref, b1_ref, w2_ref, b2_ref,
                             s_ref, f_ref, t_ref, o_ref):
    """One batch tile of the whole multimodal forward, everything resident in VMEM.

    ws/wf/wt : [D_m, 128]  bf16 per-modality feature weights, columns pre-placed at
                           their block-diagonal offsets (speech 0:32, face 32:64, ...)
    b1       : [1, 128]    f32 concatenated feature biases (lanes 96:128 zero)
    w2       : [128, 128]  bf16 [block-diag heads | W_mm | zero pad], rows 96:128 zero
    b2       : [1, 128]    f32 [head biases | b_mm | zero pad]
    s/f/t    : [TM, D_m]   f32 modality inputs for this batch tile
    o        : [TM, 128]   f32 lane-dense logit slab:
                           cols 0:7 speech, 7:14 face, 14:21 text, 21:28 multimodal
    """
    bf16 = jnp.bfloat16
    # Stage 1: three feature extractors, accumulated into one lane-dense [TM,128] feat.
    feat = jnp.dot(s_ref[...].astype(bf16), ws_ref[...],
                   preferred_element_type=jnp.float32)
    feat = feat + jnp.dot(f_ref[...].astype(bf16), wf_ref[...],
                          preferred_element_type=jnp.float32)
    feat = feat + jnp.dot(t_ref[...].astype(bf16), wt_ref[...],
                          preferred_element_type=jnp.float32)
    feat = jnp.maximum(feat + b1_ref[...], 0.0)            # [TM, 128], stays in vregs
    # Stage 2: three per-modality heads + the multimodal fusion head in ONE MXU pass.
    out = jnp.dot(feat.astype(bf16), w2_ref[...], preferred_element_type=jnp.float32)
    o_ref[...] = (out + b2_ref[...]).astype(o_ref.dtype)


def fused_multimodal_call(speech, face, text, ws, wf, wt, b1, w2, b2):
    B = speech.shape[0]
    Ds, Df, Dt = speech.shape[1], face.shape[1], text.shape[1]
    assert B % TM == 0
    grid = (B // TM,)
    const = lambda i: (0, 0)          # weights/biases: same block every step (resident)

    grid_spec = pltpu.PrefetchScalarGridSpec(
        num_scalar_prefetch=0,
        grid=grid,
        in_specs=[
            pl.BlockSpec((Ds, LANE), const),            # ws (bf16)
            pl.BlockSpec((Df, LANE), const),            # wf (bf16)
            pl.BlockSpec((Dt, LANE), const),            # wt (bf16)
            pl.BlockSpec((1, LANE), const),             # b1 (f32)
            pl.BlockSpec((LANE, LANE), const),          # w2 (bf16)
            pl.BlockSpec((1, LANE), const),             # b2 (f32)
            pl.BlockSpec((TM, Ds), lambda i: (i, 0)),   # speech tile
            pl.BlockSpec((TM, Df), lambda i: (i, 0)),   # face tile
            pl.BlockSpec((TM, Dt), lambda i: (i, 0)),   # text tile
        ],
        out_specs=pl.BlockSpec((TM, LANE), lambda i: (i, 0)),
    )

    flops = 2 * B * (Ds + Df + Dt) * LANE + 2 * B * LANE * LANE
    bytes_accessed = (
        B * (Ds + Df + Dt) * 4                    # activations in (f32)
        + (Ds + Df + Dt) * LANE * 2               # stage-1 weights (bf16)
        + LANE * LANE * 2                         # stage-2 weight (bf16)
        + 2 * LANE * 4                            # biases (f32)
        + B * LANE * 4                            # output slab (f32)
    )

    return pl.pallas_call(
        _fused_multimodal_kernel,
        out_shape=jax.ShapeDtypeStruct((B, LANE), jnp.float32),
        grid_spec=grid_spec,
        compiler_params=pltpu.CompilerParams(
            dimension_semantics=("parallel",)),       # batch axis shards across TCs (v7x)
        cost_estimate=pl.CostEstimate(
            flops=flops, transcendentals=0, bytes_accessed=bytes_accessed),
    )(ws, wf, wt, b1, w2, b2, speech, face, text)


# --------------------------- params & packing -------------------------------


def init_params(key, d_speech, d_face, d_text, f_speech, f_face, f_text):
    ks = jax.random.split(key, 7)
    s = 0.1

    def dense(k, din, dout):
        kw, kb = jax.random.split(k)
        return (s * jax.random.normal(kw, (din, dout), jnp.float32),
                s * jax.random.normal(kb, (dout,), jnp.float32))

    return {
        "speech_feat": dense(ks[0], d_speech, f_speech),
        "speech_head": dense(ks[1], f_speech, N_CLASSES),
        "face_feat": dense(ks[2], d_face, f_face),
        "face_head": dense(ks[3], f_face, N_CLASSES),
        "text_feat": dense(ks[4], d_text, f_text),
        "text_head": dense(ks[5], f_text, N_CLASSES),
        "mm": dense(ks[6], f_speech + f_face + f_text, N_CLASSES),
    }


def pack_params(params):
    """Build the fused, lane-dense (128-wide), bf16 weights once, outside the kernel."""
    ws_f, bs_f = params["speech_feat"]
    wf_f, bf_f = params["face_feat"]
    wt_f, bt_f = params["text_feat"]
    ws_h, bs_h = params["speech_head"]
    wf_h, bf_h = params["face_head"]
    wt_h, bt_h = params["text_head"]
    w_mm, b_mm = params["mm"]

    Fs, Ff, Ft = ws_f.shape[1], wf_f.shape[1], wt_f.shape[1]
    F3 = Fs + Ff + Ft

    def place_cols(w, off):
        # embed [D, F] block at column offset `off` of a [D, 128] zero slab
        slab = jnp.zeros((w.shape[0], LANE), jnp.float32)
        return slab.at[:, off:off + w.shape[1]].set(w)

    # Stage 1: per-modality weights with feature columns at block-diagonal offsets.
    ws = place_cols(ws_f, 0)           # speech features -> lanes 0:Fs
    wf = place_cols(wf_f, Fs)          # face   features -> lanes Fs:Fs+Ff
    wt = place_cols(wt_f, Fs + Ff)     # text   features -> lanes Fs+Ff:F3
    b1 = jnp.zeros((1, LANE), jnp.float32).at[0, :F3].set(
        jnp.concatenate([bs_f, bf_f, bt_f]))

    # Stage 2: [block-diag heads | W_mm] padded to [128, 128] (zero rows/cols).
    w_heads = jax.scipy.linalg.block_diag(ws_h, wf_h, wt_h)        # [F3, 21]
    w2_core = jnp.concatenate([w_heads, w_mm], axis=1)             # [F3, 28]
    w2 = jnp.zeros((LANE, LANE), jnp.float32).at[:F3, :w2_core.shape[1]].set(w2_core)
    b2 = jnp.zeros((1, LANE), jnp.float32).at[0, :4 * N_CLASSES].set(
        jnp.concatenate([bs_h, bf_h, bt_h, b_mm]))

    bf16 = jnp.bfloat16
    return (ws.astype(bf16), wf.astype(bf16), wt.astype(bf16),
            b1, w2.astype(bf16), b2)


@jax.jit
def multimodal_forward(packed, speech, face, text):
    ws, wf, wt, b1, w2, b2 = packed
    B = speech.shape[0]
    Bp = ((B + TM - 1) // TM) * TM
    if Bp != B:                        # pad batch up to a multiple of the row tile
        pad = Bp - B
        speech = jnp.pad(speech, ((0, pad), (0, 0)))
        face = jnp.pad(face, ((0, pad), (0, 0)))
        text = jnp.pad(text, ((0, pad), (0, 0)))
    slab = fused_multimodal_call(speech, face, text, ws, wf, wt, b1, w2, b2)
    # Single slice + reshape to unpack the four 7-wide heads.
    heads = slab[:B, :4 * N_CLASSES].reshape(B, 4, N_CLASSES)
    out_speech, out_face, out_text, out_mm = (heads[:, 0], heads[:, 1],
                                              heads[:, 2], heads[:, 3])
    return out_mm, out_speech, out_face, out_text


# ----------------------------------- main -----------------------------------

if __name__ == "__main__":
    B = 256                                   # amortize weight DMA / fill MXU rows
    D_SPEECH, D_FACE, D_TEXT = 16, 16, 16
    F_SPEECH, F_FACE, F_TEXT = 32, 32, 32

    key = jax.random.PRNGKey(0)
    kp, ks, kf, kt = jax.random.split(key, 4)

    params = init_params(kp, D_SPEECH, D_FACE, D_TEXT, F_SPEECH, F_FACE, F_TEXT)
    packed = pack_params(params)

    speech = jax.random.normal(ks, (B, D_SPEECH), jnp.float32)
    face = jax.random.normal(kf, (B, D_FACE), jnp.float32)
    text = jax.random.normal(kt, (B, D_TEXT), jnp.float32)

    out_mm, out_s, out_f, out_t = multimodal_forward(packed, speech, face, text)
    jax.block_until_ready((out_mm, out_s, out_f, out_t))

    # Reference check against plain JAX (unfused, f32). bf16 weights -> loose tolerance.
    def ref_sub(x, fp, hp):
        feat = jnp.maximum(x @ fp[0] + fp[1], 0.0)
        return feat @ hp[0] + hp[1], feat

    r_out_s, r_fs = ref_sub(speech, params["speech_feat"], params["speech_head"])
    r_out_f, r_ff = ref_sub(face, params["face_feat"], params["face_head"])
    r_out_t, r_ft = ref_sub(text, params["text_feat"], params["text_head"])
    r_mm = (jnp.concatenate([r_fs, r_ff, r_ft], axis=-1) @ params["mm"][0]
            + params["mm"][1])

    TOL = 5e-2
    assert out_mm.shape == (B, N_CLASSES)
    assert out_s.shape == (B, N_CLASSES)
    assert jnp.allclose(out_mm, r_mm, atol=TOL)
    assert jnp.allclose(out_s, r_out_s, atol=TOL)
    assert jnp.allclose(out_f, r_out_f, atol=TOL)
    assert jnp.allclose(out_t, r_out_t, atol=TOL)

    print("KERNEL_OK")
</pallas_src>

<mosaic_0001>
module attributes {stable_mosaic.version = 11 : i64} {
  func.func @_fused_multimodal_kernel(%arg0: i32, %arg1: memref<16x128xbf16, #tpu.memory_space<vmem>>, %arg2: memref<16x128xbf16, #tpu.memory_space<vmem>>, %arg3: memref<16x128xbf16, #tpu.memory_space<vmem>>, %arg4: memref<1x128xf32, #tpu.memory_space<vmem>>, %arg5: memref<128x128xbf16, #tpu.memory_space<vmem>>, %arg6: memref<1x128xf32, #tpu.memory_space<vmem>>, %arg7: memref<128x16xf32, #tpu.memory_space<vmem>>, %arg8: memref<128x16xf32, #tpu.memory_space<vmem>>, %arg9: memref<128x16xf32, #tpu.memory_space<vmem>>, %arg10: memref<128x128xf32, #tpu.memory_space<vmem>>) attributes {dimension_semantics = [#tpu.dimension_semantics<parallel>], iteration_bounds = array<i64: 2>, scalar_prefetch = 0 : i64, scratch_operands = 0 : i64, tpu.core_type = #tpu.core_type<tc>, window_params = [{pipeline_mode = #tpu.pipeline_mode<synchronous>, transform_indices = @transform_0, window_bounds = array<i64: 16, 128>}, {pipeline_mode = #tpu.pipeline_mode<synchronous>, transform_indices = @transform_1, window_bounds = array<i64: 16, 128>}, {pipeline_mode = #tpu.pipeline_mode<synchronous>, transform_indices = @transform_2, window_bounds = array<i64: 16, 128>}, {pipeline_mode = #tpu.pipeline_mode<synchronous>, transform_indices = @transform_3, window_bounds = array<i64: 1, 128>}, {pipeline_mode = #tpu.pipeline_mode<synchronous>, transform_indices = @transform_4, window_bounds = array<i64: 128, 128>}, {pipeline_mode = #tpu.pipeline_mode<synchronous>, transform_indices = @transform_5, window_bounds = array<i64: 1, 128>}, {transform_indices = @transform_6, window_bounds = array<i64: 128, 16>}, {transform_indices = @transform_7, window_bounds = array<i64: 128, 16>}, {transform_indices = @transform_8, window_bounds = array<i64: 128, 16>}, {transform_indices = @transform_9, window_bounds = array<i64: 128, 128>}]} {
    %c0 = arith.constant 0 : index
    %c0_0 = arith.constant 0 : index
    %0 = vector.load %arg7[%c0, %c0_0] : memref<128x16xf32, #tpu.memory_space<vmem>>, vector<128x16xf32>
    %1 = arith.truncf %0 : vector<128x16xf32> to vector<128x16xbf16>
    %c0_1 = arith.constant 0 : index
    %c0_2 = arith.constant 0 : index
    %2 = vector.load %arg1[%c0_1, %c0_2] : memref<16x128xbf16, #tpu.memory_space<vmem>>, vector<16x128xbf16>
    %cst = arith.constant dense<0.000000e+00> : vector<128x128xf32>
    %3 = tpu.matmul %1, %2, %cst {dimension_numbers = #tpu.dot_dimension_numbers<[1], [0], [0], [1], [0, 0, 1, 1], [], []>} : vector<128x16xbf16>, vector<16x128xbf16>, vector<128x128xf32> -> vector<128x128xf32>
    %c0_3 = arith.constant 0 : index
    %c0_4 = arith.constant 0 : index
    %4 = vector.load %arg8[%c0_3, %c0_4] : memref<128x16xf32, #tpu.memory_space<vmem>>, vector<128x16xf32>
    %5 = arith.truncf %4 : vector<128x16xf32> to vector<128x16xbf16>
    %c0_5 = arith.constant 0 : index
    %c0_6 = arith.constant 0 : index
    %6 = vector.load %arg2[%c0_5, %c0_6] : memref<16x128xbf16, #tpu.memory_space<vmem>>, vector<16x128xbf16>
    %cst_7 = arith.constant dense<0.000000e+00> : vector<128x128xf32>
    %7 = tpu.matmul %5, %6, %cst_7 {dimension_numbers = #tpu.dot_dimension_numbers<[1], [0], [0], [1], [0, 0, 1, 1], [], []>} : vector<128x16xbf16>, vector<16x128xbf16>, vector<128x128xf32> -> vector<128x128xf32>
    %8 = arith.addf %3, %7 : vector<128x128xf32>
    %c0_8 = arith.constant 0 : index
    %c0_9 = arith.constant 0 : index
    %9 = vector.load %arg9[%c0_8, %c0_9] : memref<128x16xf32, #tpu.memory_space<vmem>>, vector<128x16xf32>
    %10 = arith.truncf %9 : vector<128x16xf32> to vector<128x16xbf16>
    %c0_10 = arith.constant 0 : index
    %c0_11 = arith.constant 0 : index
    %11 = vector.load %arg3[%c0_10, %c0_11] : memref<16x128xbf16, #tpu.memory_space<vmem>>, vector<16x128xbf16>
    %cst_12 = arith.constant dense<0.000000e+00> : vector<128x128xf32>
    %12 = tpu.matmul %10, %11, %cst_12 {dimension_numbers = #tpu.dot_dimension_numbers<[1], [0], [0], [1], [0, 0, 1, 1], [], []>} : vector<128x16xbf16>, vector<16x128xbf16>, vector<128x128xf32> -> vector<128x128xf32>
    %13 = arith.addf %8, %12 : vector<128x128xf32>
    %c0_13 = arith.constant 0 : index
    %c0_14 = arith.constant 0 : index
    %14 = vector.load %arg4[%c0_13, %c0_14] : memref<1x128xf32, #tpu.memory_space<vmem>>, vector<1x128xf32>
    %15 = vector.broadcast %14 : vector<1x128xf32> to vector<128x128xf32>
    %16 = arith.addf %13, %15 : vector<128x128xf32>
    %cst_15 = arith.constant 0.000000e+00 : f32
    %17 = vector.broadcast %cst_15 : f32 to vector<128x128xf32>
    %18 = arith.maximumf %16, %17 : vector<128x128xf32>
    %19 = arith.truncf %18 : vector<128x128xf32> to vector<128x128xbf16>
    %c0_16 = arith.constant 0 : index
    %c0_17 = arith.constant 0 : index
    %20 = vector.load %arg5[%c0_16, %c0_17] : memref<128x128xbf16, #tpu.memory_space<vmem>>, vector<128x128xbf16>
    %cst_18 = arith.constant dense<0.000000e+00> : vector<128x128xf32>
    %21 = tpu.matmul %19, %20, %cst_18 {dimension_numbers = #tpu.dot_dimension_numbers<[1], [0], [0], [1], [0, 0, 1, 1], [], []>} : vector<128x128xbf16>, vector<128x128xbf16>, vector<128x128xf32> -> vector<128x128xf32>
    %c0_19 = arith.constant 0 : index
    %c0_20 = arith.constant 0 : index
    %22 = vector.load %arg6[%c0_19, %c0_20] : memref<1x128xf32, #tpu.memory_space<vmem>>, vector<1x128xf32>
    %23 = vector.broadcast %22 : vector<1x128xf32> to vector<128x128xf32>
    %24 = arith.addf %21, %23 : vector<128x128xf32>
    %c0_21 = arith.constant 0 : index
    %c0_22 = arith.constant 0 : index
    %25 = vector.load %arg10[%c0_21, %c0_22] : memref<128x128xf32, #tpu.memory_space<vmem>>, vector<128x128xf32>
    tpu.vector_store %arg10[%c0_21, %c0_22], %24 {strides = array<i32>} : memref<128x128xf32, #tpu.memory_space<vmem>>, vector<128x128xf32>,
    return
  }
  func.func @transform_0(%arg0: i32) -> (i32, i32) {
    %c0_i32 = arith.constant 0 : i32
    %c0_i32_0 = arith.constant 0 : i32
    %c0_i32_1 = arith.constant 0 : i32
    return %c0_i32, %c0_i32_0 : i32, i32
  }
  func.func @transform_1(%arg0: i32) -> (i32, i32) {
    %c0_i32 = arith.constant 0 : i32
    %c0_i32_0 = arith.constant 0 : i32
    %c0_i32_1 = arith.constant 0 : i32
    return %c0_i32, %c0_i32_0 : i32, i32
  }
  func.func @transform_2(%arg0: i32) -> (i32, i32) {
    %c0_i32 = arith.constant 0 : i32
    %c0_i32_0 = arith.constant 0 : i32
    %c0_i32_1 = arith.constant 0 : i32
    return %c0_i32, %c0_i32_0 : i32, i32
  }
  func.func @transform_3(%arg0: i32) -> (i32, i32) {
    %c0_i32 = arith.constant 0 : i32
    %c0_i32_0 = arith.constant 0 : i32
    %c0_i32_1 = arith.constant 0 : i32
    return %c0_i32, %c0_i32_0 : i32, i32
  }
  func.func @transform_4(%arg0: i32) -> (i32, i32) {
    %c0_i32 = arith.constant 0 : i32
    %c0_i32_0 = arith.constant 0 : i32
    %c0_i32_1 = arith.constant 0 : i32
    return %c0_i32, %c0_i32_0 : i32, i32
  }
  func.func @transform_5(%arg0: i32) -> (i32, i32) {
    %c0_i32 = arith.constant 0 : i32
    %c0_i32_0 = arith.constant 0 : i32
    %c0_i32_1 = arith.constant 0 : i32
    return %c0_i32, %c0_i32_0 : i32, i32
  }
  func.func @transform_6(%arg0: i32) -> (i32, i32) {
    %c0_i32 = arith.constant 0 : i32
    %c0_i32_0 = arith.constant 0 : i32
    return %arg0, %c0_i32 : i32, i32
  }
  func.func @transform_7(%arg0: i32) -> (i32, i32) {
    %c0_i32 = arith.constant 0 : i32
    %c0_i32_0 = arith.constant 0 : i32
    return %arg0, %c0_i32 : i32, i32
  }
  func.func @transform_8(%arg0: i32) -> (i32, i32) {
    %c0_i32 = arith.constant 0 : i32
    %c0_i32_0 = arith.constant 0 : i32
    return %arg0, %c0_i32 : i32, i32
  }
  func.func @transform_9(%arg0: i32) -> (i32, i32) {
    %c0_i32 = arith.constant 0 : i32
    %c0_i32_0 = arith.constant 0 : i32
    return %arg0, %c0_i32 : i32, i32
  }
}

</mosaic_0001>

<llo_original>
// kernel: multimodal_forward.1
$region0: #{multimodal_forward.1}
  #allocation0 [shape = 'u32[]', space=smem, size = 0x4, offset = 0x4, fixed_abs, tag = 'smem constant byte address 0x4 - core index']
  #allocation1 [shape = 'u32[144,128]{1,0:T(1,128)}', space=vmem, size = 0x12000, scoped, tag = 'internal scratch']
  %s0 = inlined_call_operand.vmem [shape: bf16[16,128], index: 0, kind: input, shape index: {}]
  %s1 = inlined_call_operand.vmem [shape: bf16[16,128], index: 1, kind: input, shape index: {}]
  %s2 = inlined_call_operand.vmem [shape: bf16[16,128], index: 2, kind: input, shape index: {}]
  %s3 = inlined_call_operand.vmem [shape: f32[1,128], index: 3, kind: input, shape index: {}]
  %s4 = inlined_call_operand.vmem [shape: bf16[128,128], index: 4, kind: input, shape index: {}]
  %s5 = inlined_call_operand.vmem [shape: f32[1,128], index: 5, kind: input, shape index: {}]
  %s6 = inlined_call_operand.vmem [shape: f32[256,16], index: 6, kind: input, shape index: {}]
  %s7 = inlined_call_operand.vmem [shape: f32[256,16], index: 7, kind: input, shape index: {}]
  %s8 = inlined_call_operand.vmem [shape: f32[256,16], index: 8, kind: input, shape index: {}]
  %s9 = inlined_call_operand.vmem [shape: f32[256,128], index: 9, kind: output, shape index: {}]
  %s10 = sld [smem:[#allocation0]]
  $region69: #{multimodal_forward.1} parent=0
    _
  %s12 = ssub.s32 1, %s10
  %s13 = scalar_select 0, %s12, %s10
  loop: start=0, step=1, limit=4
  $region2: #{multimodal_forward.1} parent=0 // loop_pre_header
    _
  $region3: #{multimodal_forward.1} parent=0 // loop_header
    %s15 = sphi 0, %s19
    %p16 = scmp.ge.s32.totalorder %s15, 4
    %s23 = sphi 0, %s23
    %s25 = sphi 0, %s23
    %s26 = sphi 0, %s25
    %s40 = sphi 0, %s26
    %s44 = sphi 0, %s44
    %s46 = sphi 0, %s44
    %s47 = sphi 0, %s46
    %s61 = sphi 0, %s47
    %s65 = sphi 0, %s65
    %s67 = sphi 0, %s65
    %s68 = sphi 0, %s67
    %s82 = sphi 0, %s68
    %s86 = sphi 0, %s86
    %s88 = sphi 0, %s86
    %s89 = sphi 0, %s88
    %s103 = sphi 0, %s89
    %s107 = sphi 0, %s107
    %s109 = sphi 0, %s107
    %s110 = sphi 0, %s109
    %s124 = sphi 0, %s110
    %s128 = sphi 0, %s128
    %s130 = sphi 0, %s128
    %s131 = sphi 0, %s130
    %s145 = sphi 0, %s131
    %s151 = sphi 0, %s153
    %s154 = sphi 0, %s151
    %s155 = sphi 0, %s154
    %s171 = sphi 0, %s155
    %s177 = sphi 0, %s179
    %s180 = sphi 0, %s177
    %s181 = sphi 0, %s180
    %s197 = sphi 0, %s181
    %s203 = sphi 0, %s205
    %s206 = sphi 0, %s203
    %s207 = sphi 0, %s206
    %s223 = sphi 0, %s207
    %s229 = sphi 0, %s231
    %s232 = sphi 0, %s229
    %s233 = sphi 0, %s232
    %s249 = sphi 0, %s233
  $region4: #{multimodal_forward.1} parent=0 // loop_header_branch
    %18 = sbr.rel (%p16) target = $region8
  $region5: #{multimodal_forward.1} parent=0 // loop_body
    %s20 = ssub.s32 %s15, 1
    %s21 = ssub.s32 %s15, 2
    %s22 = sadd.s32 %s15, 1
    %s24 = sadd.s32 %s23, 1
    %p27 = scmp.eq.s32.totalorder %s15, 1
    %p28 = scmp.ne.s32.totalorder %s23, %s25
    %p29 = scmp.eq.s32.totalorder %s15, 0
    %p30 = por %p28, %p29
    %p31 = scmp.ne.s32.totalorder %s23, %s25
    %p32 = scmp.eq.s32.totalorder %s20, 1
    %p33 = por %p31, %p32
    %p34 = scmp.ne.s32.totalorder %s25, %s26
    %p35 = scmp.eq.s32.totalorder %s20, 0
    %p36 = por %p34, %p35
    %p37 = scmp.ne.s32.totalorder %s25, %s26
    %p38 = scmp.eq.s32.totalorder %s21, 1
    %p39 = por %p37, %p38
    %p41 = scmp.ne.s32.totalorder %s26, %s40
    %p42 = scmp.eq.s32.totalorder %s21, 0
    %p43 = por %p41, %p42
    %s45 = sadd.s32 %s44, 1
    %p48 = scmp.eq.s32.totalorder %s15, 1
    %p49 = scmp.ne.s32.totalorder %s44, %s46
    %p50 = scmp.eq.s32.totalorder %s15, 0
    %p51 = por %p49, %p50
    %p52 = scmp.ne.s32.totalorder %s44, %s46
    %p53 = scmp.eq.s32.totalorder %s20, 1
    %p54 = por %p52, %p53
    %p55 = scmp.ne.s32.totalorder %s46, %s47
    %p56 = scmp.eq.s32.totalorder %s20, 0
    %p57 = por %p55, %p56
    %p58 = scmp.ne.s32.totalorder %s46, %s47
    %p59 = scmp.eq.s32.totalorder %s21, 1
    %p60 = por %p58, %p59
    %p62 = scmp.ne.s32.totalorder %s47, %s61
    %p63 = scmp.eq.s32.totalorder %s21, 0
    %p64 = por %p62, %p63
    %s66 = sadd.s32 %s65, 1
    %p69 = scmp.eq.s32.totalorder %s15, 1
    %p70 = scmp.ne.s32.totalorder %s65, %s67
    %p71 = scmp.eq.s32.totalorder %s15, 0
    %p72 = por %p70, %p71
    %p73 = scmp.ne.s32.totalorder %s65, %s67
    %p74 = scmp.eq.s32.totalorder %s20, 1
    %p75 = por %p73, %p74
    %p76 = scmp.ne.s32.totalorder %s67, %s68
    %p77 = scmp.eq.s32.totalorder %s20, 0
    %p78 = por %p76, %p77
    %p79 = scmp.ne.s32.totalorder %s67, %s68
    %p80 = scmp.eq.s32.totalorder %s21, 1
    %p81 = por %p79, %p80
    %p83 = scmp.ne.s32.totalorder %s68, %s82
    %p84 = scmp.eq.s32.totalorder %s21, 0
    %p85 = por %p83, %p84
    %s87 = sadd.s32 %s86, 1
    %p90 = scmp.eq.s32.totalorder %s15, 1
    %p91 = scmp.ne.s32.totalorder %s86, %s88
    %p92 = scmp.eq.s32.totalorder %s15, 0
    %p93 = por %p91, %p92
    %p94 = scmp.ne.s32.totalorder %s86, %s88
    %p95 = scmp.eq.s32.totalorder %s20, 1
    %p96 = por %p94, %p95
    %p97 = scmp.ne.s32.totalorder %s88, %s89
    %p98 = scmp.eq.s32.totalorder %s20, 0
    %p99 = por %p97, %p98
    %p100 = scmp.ne.s32.totalorder %s88, %s89
    %p101 = scmp.eq.s32.totalorder %s21, 1
    %p102 = por %p100, %p101
    %p104 = scmp.ne.s32.totalorder %s89, %s103
    %p105 = scmp.eq.s32.totalorder %s21, 0
    %p106 = por %p104, %p105
    %s108 = sadd.s32 %s107, 1
    %p111 = scmp.eq.s32.totalorder %s15, 1
    %p112 = scmp.ne.s32.totalorder %s107, %s109
    %p113 = scmp.eq.s32.totalorder %s15, 0
    %p114 = por %p112, %p113
    %p115 = scmp.ne.s32.totalorder %s107, %s109
    %p116 = scmp.eq.s32.totalorder %s20, 1
    %p117 = por %p115, %p116
    %p118 = scmp.ne.s32.totalorder %s109, %s110
    %p119 = scmp.eq.s32.totalorder %s20, 0
    %p120 = por %p118, %p119
    %p121 = scmp.ne.s32.totalorder %s109, %s110
    %p122 = scmp.eq.s32.totalorder %s21, 1
    %p123 = por %p121, %p122
    %p125 = scmp.ne.s32.totalorder %s110, %s124
    %p126 = scmp.eq.s32.totalorder %s21, 0
    %p127 = por %p125, %p126
    %s129 = sadd.s32 %s128, 1
    %p132 = scmp.eq.s32.totalorder %s15, 1
    %p133 = scmp.ne.s32.totalorder %s128, %s130
    %p134 = scmp.eq.s32.totalorder %s15, 0
    %p135 = por %p133, %p134
    %p136 = scmp.ne.s32.totalorder %s128, %s130
    %p137 = scmp.eq.s32.totalorder %s20, 1
    %p138 = por %p136, %p137
    %p139 = scmp.ne.s32.totalorder %s130, %s131
    %p140 = scmp.eq.s32.totalorder %s20, 0
    %p141 = por %p139, %p140
    %p142 = scmp.ne.s32.totalorder %s130, %s131
    %p143 = scmp.eq.s32.totalorder %s21, 1
    %p144 = por %p142, %p143
    %p146 = scmp.ne.s32.totalorder %s131, %s145
    %p147 = scmp.eq.s32.totalorder %s21, 0
    %p148 = por %p146, %p147
    %s149 = ssub.s32 %s15, %s22
    %p150 = scmp.eq.s32.totalorder %s149, 0
    %s152 = sadd.s32 %s151, 1
    %s153 = scalar_select %p150, %s151, %s152
    %p156 = pneg %p150
    %p157 = scmp.eq.s32.totalorder %s15, 1
    %p158 = por %p156, %p157
    %p159 = scmp.ne.s32.totalorder %s151, %s154
    %p160 = scmp.eq.s32.totalorder %s15, 0
    %p161 = por %p159, %p160
    %p162 = scmp.ne.s32.totalorder %s151, %s154
    %p163 = scmp.eq.s32.totalorder %s20, 1
    %p164 = por %p162, %p163
    %p165 = scmp.ne.s32.totalorder %s154, %s155
    %p166 = scmp.eq.s32.totalorder %s20, 0
    %p167 = por %p165, %p166
    %p168 = scmp.ne.s32.totalorder %s154, %s155
    %p169 = scmp.eq.s32.totalorder %s21, 1
    %p170 = por %p168, %p169
    %p172 = scmp.ne.s32.totalorder %s155, %s171
    %p173 = scmp.eq.s32.totalorder %s21, 0
    %p174 = por %p172, %p173
    %s175 = ssub.s32 %s15, %s22
    %p176 = scmp.eq.s32.totalorder %s175, 0
    %s178 = sadd.s32 %s177, 1
    %s179 = scalar_select %p176, %s177, %s178
    %p182 = pneg %p176
    %p183 = scmp.eq.s32.totalorder %s15, 1
    %p184 = por %p182, %p183
    %p185 = scmp.ne.s32.totalorder %s177, %s180
    %p186 = scmp.eq.s32.totalorder %s15, 0
    %p187 = por %p185, %p186
    %p188 = scmp.ne.s32.totalorder %s177, %s180
    %p189 = scmp.eq.s32.totalorder %s20, 1
    %p190 = por %p188, %p189
    %p191 = scmp.ne.s32.totalorder %s180, %s181
    %p192 = scmp.eq.s32.totalorder %s20, 0
    %p193 = por %p191, %p192
    %p194 = scmp.ne.s32.totalorder %s180, %s181
    %p195 = scmp.eq.s32.totalorder %s21, 1
    %p196 = por %p194, %p195
    %p198 = scmp.ne.s32.totalorder %s181, %s197
    %p199 = scmp.eq.s32.totalorder %s21, 0
    %p200 = por %p198, %p199
    %s201 = ssub.s32 %s15, %s22
    %p202 = scmp.eq.s32.totalorder %s201, 0
    %s204 = sadd.s32 %s203, 1
    %s205 = scalar_select %p202, %s203, %s204
    %p208 = pneg %p202
    %p209 = scmp.eq.s32.totalorder %s15, 1
    %p210 = por %p208, %p209
    %p211 = scmp.ne.s32.totalorder %s203, %s206
    %p212 = scmp.eq.s32.totalorder %s15, 0
    %p213 = por %p211, %p212
    %p214 = scmp.ne.s32.totalorder %s203, %s206
    %p215 = scmp.eq.s32.totalorder %s20, 1
    %p216 = por %p214, %p215
    %p217 = scmp.ne.s32.totalorder %s206, %s207
    %p218 = scmp.eq.s32.totalorder %s20, 0
    %p219 = por %p217, %p218
    %p220 = scmp.ne.s32.totalorder %s206, %s207
    %p221 = scmp.eq.s32.totalorder %s21, 1
    %p222 = por %p220, %p221
    %p224 = scmp.ne.s32.totalorder %s207, %s223
    %p225 = scmp.eq.s32.totalorder %s21, 0
    %p226 = por %p224, %p225
    %s227 = ssub.s32 %s15, %s22
    %p228 = scmp.eq.s32.totalorder %s227, 0
    %s230 = sadd.s32 %s229, 1
    %s231 = scalar_select %p228, %s229, %s230
    %p234 = pneg %p228
    %p235 = scmp.eq.s32.totalorder %s15, 1
    %p236 = por %p234, %p235
    %p237 = scmp.ne.s32.totalorder %s229, %s232
    %p238 = scmp.eq.s32.totalorder %s15, 0
    %p239 = por %p237, %p238
    %p240 = scmp.ne.s32.totalorder %s229, %s232
    %p241 = scmp.eq.s32.totalorder %s20, 1
    %p242 = por %p240, %p241
    %p243 = scmp.ne.s32.totalorder %s232, %s233
    %p244 = scmp.eq.s32.totalorder %s20, 0
    %p245 = por %p243, %p244
    %p246 = scmp.ne.s32.totalorder %s232, %s233
    %p247 = scmp.eq.s32.totalorder %s21, 1
    %p248 = por %p246, %p247
    %p250 = scmp.ne.s32.totalorder %s233, %s249
    %p251 = scmp.eq.s32.totalorder %s21, 0
    %p252 = por %p250, %p251
    %p253 = scmp.le.s32.totalorder 1, %s15
    %p254 = scmp.lt.s32.totalorder %s15, 3
    %p255 = pnand %p253, %p254
    %p256 = pneg %p255
    // Predicated region
    $region9: #{multimodal_forward.1} parent=5 // pred_check
      _
    $region10: #{multimodal_forward.1} parent=5 // pred_check_branch
      %258 = sbr.rel (%p255) target = $region12
    $region11: #{multimodal_forward.1} parent=5 // pred_region
      %s259 = ssub.s32 %s15, 1
      // Predicated region
      $region13: #{multimodal_forward.1} parent=11 // pred_check
        %p260 = pneg %p36
      $region14: #{multimodal_forward.1} parent=11 // pred_check_branch
        %262 = sbr.rel (%p260) target = $region16
      $region15: #{multimodal_forward.1} parent=11 // pred_region
        _
      $region16: #{multimodal_forward.1} parent=11 // pred_fallthru
        _
      // Predicated region
      $region17: #{multimodal_forward.1} parent=11 // pred_check
        %p263 = pneg %p57
      $region18: #{multimodal_forward.1} parent=11 // pred_check_branch
        %265 = sbr.rel (%p263) target = $region20
      $region19: #{multimodal_forward.1} parent=11 // pred_region
        _
      $region20: #{multimodal_forward.1} parent=11 // pred_fallthru
        _
      // Predicated region
      $region21: #{multimodal_forward.1} parent=11 // pred_check
        %p266 = pneg %p78
      $region22: #{multimodal_forward.1} parent=11 // pred_check_branch
        %268 = sbr.rel (%p266) target = $region24
      $region23: #{multimodal_forward.1} parent=11 // pred_region
        _
      $region24: #{multimodal_forward.1} parent=11 // pred_fallthru
        _
      // Predicated region
      $region25: #{multimodal_forward.1} parent=11 // pred_check
        %p269 = pneg %p99
      $region26: #{multimodal_forward.1} parent=11 // pred_check_branch
        %271 = sbr.rel (%p269) target = $region28
      $region27: #{multimodal_forward.1} parent=11 // pred_region
        _
      $region28: #{multimodal_forward.1} parent=11 // pred_fallthru
        _
      // Predicated region
      $region29: #{multimodal_forward.1} parent=11 // pred_check
        %p272 = pneg %p120
      $region30: #{multimodal_forward.1} parent=11 // pred_check_branch
        %274 = sbr.rel (%p272) target = $region32
      $region31: #{multimodal_forward.1} parent=11 // pred_region
        _
      $region32: #{multimodal_forward.1} parent=11 // pred_fallthru
        _
      // Predicated region
      $region33: #{multimodal_forward.1} parent=11 // pred_check
        %p275 = pneg %p141
      $region34: #{multimodal_forward.1} parent=11 // pred_check_branch
        %277 = sbr.rel (%p275) target = $region36
      $region35: #{multimodal_forward.1} parent=11 // pred_region
        _
      $region36: #{multimodal_forward.1} parent=11 // pred_fallthru
        _
    $region12: #{multimodal_forward.1} parent=5 // pred_fallthru
      _
    %p278 = scmp.lt.s32.totalorder %s15, 2
    // Predicated region
    $region37: #{multimodal_forward.1} parent=5 // pred_check
      %p279 = pneg %p278
    $region38: #{multimodal_forward.1} parent=5 // pred_check_branch
      %281 = sbr.rel (%p279) target = $region40
    $region39: #{multimodal_forward.1} parent=5 // pred_region
      // Predicated region
      $region41: #{multimodal_forward.1} parent=39 // pred_check
        %p282 = pneg %p161
      $region42: #{multimodal_forward.1} parent=39 // pred_check_branch
        %284 = sbr.rel (%p282) target = $region44
      $region43: #{multimodal_forward.1} parent=39 // pred_region
        %s285 = smul.u32 16, %s15
        %p286 = scmp.lt.s32.totalorder %s285, 31
        %s287 = scalar_select %p286, %s285, 31
        %s288 = smul.addr %s287, 8
        %s289 = scalar_lea.vmem %s6, %s288
        %s290 = smul.u32 16, %s15
      $region44: #{multimodal_forward.1} parent=39 // pred_fallthru
        _
      // Predicated region
      $region45: #{multimodal_forward.1} parent=39 // pred_check
        %p291 = pneg %p187
      $region46: #{multimodal_forward.1} parent=39 // pred_check_branch
        %293 = sbr.rel (%p291) target = $region48
      $region47: #{multimodal_forward.1} parent=39 // pred_region
        %s294 = smul.u32 16, %s15
        %p295 = scmp.lt.s32.totalorder %s294, 31
        %s296 = scalar_select %p295, %s294, 31
        %s297 = smul.addr %s296, 8
        %s298 = scalar_lea.vmem %s7, %s297
        %s299 = smul.u32 16, %s15
      $region48: #{multimodal_forward.1} parent=39 // pred_fallthru
        _
      // Predicated region
      $region49: #{multimodal_forward.1} parent=39 // pred_check
        %p300 = pneg %p213
      $region50: #{multimodal_forward.1} parent=39 // pred_check_branch
        %302 = sbr.rel (%p300) target = $region52
      $region51: #{multimodal_forward.1} parent=39 // pred_region
        %s303 = smul.u32 16, %s15
        %p304 = scmp.lt.s32.totalorder %s303, 31
        %s305 = scalar_select %p304, %s303, 31
        %s306 = smul.addr %s305, 8
        %s307 = scalar_lea.vmem %s8, %s306
        %s308 = smul.u32 16, %s15
      $region52: #{multimodal_forward.1} parent=39 // pred_fallthru
        _
    $region40: #{multimodal_forward.1} parent=5 // pred_fallthru
      _
    %p309 = scmp.le.s32.totalorder 1, %s15
    %p310 = scmp.lt.s32.totalorder %s15, 3
    %p311 = pnand %p309, %p310
    %p312 = pneg %p311
    // Predicated region
    $region53: #{multimodal_forward.1} parent=5 // pred_check
      _
    $region54: #{multimodal_forward.1} parent=5 // pred_check_branch
      %314 = sbr.rel (%p311) target = $region56
    $region55: #{multimodal_forward.1} parent=5 // pred_region
      %s315 = ssub.s32 %s15, 1
      %p316 = pneg %p36
      %p317 = pneg %p33
      %p318 = pneg %p57
      %p319 = pneg %p54
      %p320 = pneg %p78
      %p321 = pneg %p75
      %p322 = pneg %p99
      %p323 = pneg %p96
      %p324 = pneg %p120
      %p325 = pneg %p117
      %p326 = pneg %p141
      %p327 = pneg %p138
      %s328 = smul.u32 16, %s20
      %p329 = scmp.lt.s32.totalorder %s328, 31
      %s330 = scalar_select %p329, %s328, 31
      %s331 = smul.addr %s330, 8
      %s332 = scalar_lea.vmem %s6, %s331
      %p333 = pneg %p167
      %p334 = pneg %p164
      %s335 = smul.u32 16, %s20
      %p336 = scmp.lt.s32.totalorder %s335, 31
      %s337 = scalar_select %p336, %s335, 31
      %s338 = smul.addr %s337, 8
      %s339 = scalar_lea.vmem %s7, %s338
      %p340 = pneg %p193
      %p341 = pneg %p190
      %s342 = smul.u32 16, %s20
      %p343 = scmp.lt.s32.totalorder %s342, 31
      %s344 = scalar_select %p343, %s342, 31
      %s345 = smul.addr %s344, 8
      %s346 = scalar_lea.vmem %s8, %s345
      %p347 = pneg %p219
      %p348 = pneg %p216
      %p349 = pneg %p245
      %p350 = pneg %p242
      %s351 = smul.u32 16, %s20
      %p352 = scmp.lt.s32.totalorder %s351, 31
      %s353 = scalar_select %p352, %s351, 31
      %s354 = smul.addr %s353, 8
      %s355 = scalar_lea.vmem %s9, %s354
      %s356 = smul.u32 16, %s20
      %p357 = scmp.lt.s32.totalorder %s356, 31
      %s358 = scalar_select %p357, %s356, 31
      %s359 = smul.addr %s358, 8
      %s360 = scalar_lea.vmem %s6, %s359
      %s361 = smul.u32 16, %s20
      %s362 = smul.u32 16, %s20
      %p363 = scmp.lt.s32.totalorder %s362, 31
      %s364 = scalar_select %p363, %s362, 31
      %s365 = smul.addr %s364, 8
      %s366 = scalar_lea.vmem %s7, %s365
      %s367 = smul.u32 16, %s20
      %s368 = smul.u32 16, %s20
      %p369 = scmp.lt.s32.totalorder %s368, 31
      %s370 = scalar_select %p369, %s368, 31
      %s371 = smul.addr %s370, 8
      %s372 = scalar_lea.vmem %s8, %s371
      %s373 = smul.u32 16, %s20
      %s374 = smul.u32 16, %s20
      %p375 = scmp.lt.s32.totalorder %s374, 31
      %s376 = scalar_select %p375, %s374, 31
      %s377 = smul.addr %s376, 8
      %s378 = scalar_lea.vmem %s9, %s377
      %s379 = smul.u32 16, %s20
      %v381 = vld [vmem:[%s360] sm:$0xff]
      %v382 = vld [vmem:[%s360 + $0x8] sm:$0xff]
      %v383 = vld [vmem:[%s360 + $0x10] sm:$0xff]
      %v384 = vld [vmem:[%s360 + $0x18] sm:$0xff]
      %v385 = vld [vmem:[%s360 + $0x20] sm:$0xff]
      %v386 = vld [vmem:[%s360 + $0x28] sm:$0xff]
      %v387 = vld [vmem:[%s360 + $0x30] sm:$0xff]
      %v388 = vld [vmem:[%s360 + $0x38] sm:$0xff]
      %v389 = vld [vmem:[%s360 + $0x40] sm:$0xff]
      %v390 = vld [vmem:[%s360 + $0x48] sm:$0xff]
      %v391 = vld [vmem:[%s360 + $0x50] sm:$0xff]
      %v392 = vld [vmem:[%s360 + $0x58] sm:$0xff]
      %v393 = vld [vmem:[%s360 + $0x60] sm:$0xff]
      %v394 = vld [vmem:[%s360 + $0x68] sm:$0xff]
      %v395 = vld [vmem:[%s360 + $0x70] sm:$0xff]
      %v396 = vld [vmem:[%s360 + $0x78] sm:$0xff]
      %v397 = vpack.c.bf16 %v382, %v381
      %v398 = vpack.c.bf16 %v384, %v383
      %v399 = vpack.c.bf16 %v386, %v385
      %v400 = vpack.c.bf16 %v388, %v387
      %v401 = vpack.c.bf16 %v390, %v389
      %v402 = vpack.c.bf16 %v392, %v391
      %v403 = vpack.c.bf16 %v394, %v393
      %v404 = vpack.c.bf16 %v396, %v395
      %v405 = vld [vmem:[%s0] sm:$0xf]
      %v406 = vld [vmem:[%s0 + $0x4] sm:$0xf]
      %v407 = vld [vmem:[%s366] sm:$0xff]
      %v408 = vld [vmem:[%s366 + $0x8] sm:$0xff]
      %v409 = vld [vmem:[%s366 + $0x10] sm:$0xff]
      %v410 = vld [vmem:[%s366 + $0x18] sm:$0xff]
      %v411 = vld [vmem:[%s366 + $0x20] sm:$0xff]
      %v412 = vld [vmem:[%s366 + $0x28] sm:$0xff]
      %v413 = vld [vmem:[%s366 + $0x30] sm:$0xff]
      %v414 = vld [vmem:[%s366 + $0x38] sm:$0xff]
      %v415 = vld [vmem:[%s366 + $0x40] sm:$0xff]
      %v416 = vld [vmem:[%s366 + $0x48] sm:$0xff]
      %v417 = vld [vmem:[%s366 + $0x50] sm:$0xff]
      %v418 = vld [vmem:[%s366 + $0x58] sm:$0xff]
      %v419 = vld [vmem:[%s366 + $0x60] sm:$0xff]
      %v420 = vld [vmem:[%s366 + $0x68] sm:$0xff]
      %v421 = vld [vmem:[%s366 + $0x70] sm:$0xff]
      %v422 = vld [vmem:[%s366 + $0x78] sm:$0xff]
      %v423 = vpack.c.bf16 %v408, %v407
      %v424 = vpack.c.bf16 %v410, %v409
      %v425 = vpack.c.bf16 %v412, %v411
      %v426 = vpack.c.bf16 %v414, %v413
      %v427 = vpack.c.bf16 %v416, %v415
      %v428 = vpack.c.bf16 %v418, %v417
      %v429 = vpack.c.bf16 %v420, %v419
      %v430 = vpack.c.bf16 %v422, %v421
      %v431 = vld [vmem:[%s1] sm:$0xf]
      %v432 = vld [vmem:[%s1 + $0x4] sm:$0xf]
      %v435 = vunpack.c.l.b16 %v431
      %v436 = vunpack.c.l.b16 %v432
      %v437 = vpack.c.b16 %v436, %v435
      %vm439 = vcmask 130048
      %v441 = vsel %vm439, %v423, 0
      %v444 = vsel %vm439, %v424, 0
      %v447 = vsel %vm439, %v425, 0
      %v450 = vsel %vm439, %v426, 0
      %v453 = vsel %vm439, %v427, 0
      %v456 = vsel %vm439, %v428, 0
      %v459 = vsel %vm439, %v429, 0
      %v462 = vsel %vm439, %v430, 0
      %464 = vmatprep.subr.bf16.mxu0 0
      %465 = vmatpush1.bf16.msra.mxu0 0
      %466 = vmatprep.subr.bf16.mxu0 0
      %467 = vmatpush1.bf16.msra.mxu0 0
      %468 = vmatprep.subr.bf16.mxu0 0
      %469 = vmatpush1.bf16.msra.mxu0 0
      %470 = vmatprep.subr.bf16.mxu0 0
      %471 = vmatpush1.bf16.msra.mxu0 0
      %472 = vmatprep.subr.bf16.mxu0 0
      %473 = vmatpush1.bf16.msra.mxu0 0
      %474 = vmatprep.subr.bf16.mxu0 0
      %475 = vmatpush1.bf16.msra.mxu0 0
      %476 = vmatprep.subr.bf16.mxu0 0
      %477 = vmatpush1.bf16.msra.mxu0 0
      %478 = vmatprep.subr.bf16.mxu0 0
      %479 = vmatpush1.bf16.msra.mxu0 %v437
      %480 = vmatprep.subr.bf16.mxu0 0
      %481 = vmatpush2.bf16.msra.mxu0 0
      %482 = vmatprep.subr.bf16.mxu0 0
      %483 = vmatpush2.bf16.msra.mxu0 0
      %484 = vmatprep.subr.bf16.mxu0 0
      %485 = vmatpush2.bf16.msra.mxu0 0
      %486 = vmatprep.subr.bf16.mxu0 0
      %487 = vmatpush2.bf16.msra.mxu0 0
      %488 = vmatprep.subr.bf16.mxu0 0
      %489 = vmatpush2.bf16.msra.mxu0 0
      %490 = vmatprep.subr.bf16.mxu0 0
      %491 = vmatpush2.bf16.msra.mxu0 0
      %492 = vmatprep.subr.bf16.mxu0 0
      %493 = vmatpush2.bf16.msra.mxu0 0
      %494 = vmatprep.subr.bf16.mxu0 0
      %495 = vmatpush2.bf16.msra.mxu0 0
      %496 = vmatprep.mubr.bf16.mxu0 0
      %497 = vmatmul.mubr.bf16.gmra.mxu0 %v441
      %v498 = vpop.f32.mrf.mxu0
      %v499 = vadd.f32 0.0, %v498
      %v500 = vpop.f32.mrf.mxu0
      %v501 = vpop.f32.mrf.mxu0
      %v502 = vadd.f32 0.0, %v501
      %v503 = vpop.f32.mrf.mxu0
      %504 = vmatprep.mubr.bf16.mxu0 0
      %505 = vmatmul.mubr.bf16.gmra.mxu0 %v444
      %v506 = vpop.f32.mrf.mxu0
      %v507 = vadd.f32 0.0, %v506
      %v508 = vpop.f32.mrf.mxu0
      %v509 = vpop.f32.mrf.mxu0
      %v510 = vadd.f32 0.0, %v509
      %v511 = vpop.f32.mrf.mxu0
      %512 = vmatprep.mubr.bf16.mxu0 0
      %513 = vmatmul.mubr.bf16.gmra.mxu0 %v447
      %v514 = vpop.f32.mrf.mxu0
      %v515 = vadd.f32 0.0, %v514
      %v516 = vpop.f32.mrf.mxu0
      %v517 = vpop.f32.mrf.mxu0
      %v518 = vadd.f32 0.0, %v517
      %v519 = vpop.f32.mrf.mxu0
      %520 = vmatprep.mubr.bf16.mxu0 0
      %521 = vmatmul.mubr.bf16.gmra.mxu0 %v450
      %v522 = vpop.f32.mrf.mxu0
      %v523 = vadd.f32 0.0, %v522
      %v524 = vpop.f32.mrf.mxu0
      %v525 = vpop.f32.mrf.mxu0
      %v526 = vadd.f32 0.0, %v525
      %v527 = vpop.f32.mrf.mxu0
      %528 = vmatprep.mubr.bf16.mxu0 0
      %529 = vmatmul.mubr.bf16.gmra.mxu0 %v453
      %v530 = vpop.f32.mrf.mxu0
      %v531 = vadd.f32 0.0, %v530
      %v532 = vpop.f32.mrf.mxu0
      %v533 = vpop.f32.mrf.mxu0
      %v534 = vadd.f32 0.0, %v533
      %v535 = vpop.f32.mrf.mxu0
      %536 = vmatprep.mubr.bf16.mxu0 0
      %537 = vmatmul.mubr.bf16.gmra.mxu0 %v456
      %v538 = vpop.f32.mrf.mxu0
      %v539 = vadd.f32 0.0, %v538
      %v540 = vpop.f32.mrf.mxu0
      %v541 = vpop.f32.mrf.mxu0
      %v542 = vadd.f32 0.0, %v541
      %v543 = vpop.f32.mrf.mxu0
      %544 = vmatprep.mubr.bf16.mxu0 0
      %545 = vmatmul.mubr.bf16.gmra.mxu0 %v459
      %v546 = vpop.f32.mrf.mxu0
      %v547 = vadd.f32 0.0, %v546
      %v548 = vpop.f32.mrf.mxu0
      %v549 = vpop.f32.mrf.mxu0
      %v550 = vadd.f32 0.0, %v549
      %v551 = vpop.f32.mrf.mxu0
      %552 = vmatprep.mubr.bf16.mxu0 0
      %553 = vmatmul.mubr.bf16.gmra.mxu0 %v462
      %v554 = vpop.f32.mrf.mxu0
      %v555 = vadd.f32 0.0, %v554
      %v556 = vpop.f32.mrf.mxu0
      %v557 = vpop.f32.mrf.mxu0
      %v558 = vadd.f32 0.0, %v557
      %v559 = vpop.f32.mrf.mxu0
      %560 = vdwg.mxu0
      %v563 = vunpack.c.l.b16 %v405
      %v564 = vunpack.c.l.b16 %v406
      %v565 = vpack.c.b16 %v564, %v563
      %v568 = vsel %vm439, %v397, 0
      %v571 = vsel %vm439, %v398, 0
      %v574 = vsel %vm439, %v399, 0
      %v577 = vsel %vm439, %v400, 0
      %v580 = vsel %vm439, %v401, 0
      %v583 = vsel %vm439, %v402, 0
      %v586 = vsel %vm439, %v403, 0
      %v589 = vsel %vm439, %v404, 0
      %591 = vmatprep.subr.bf16.mxu0 0
      %592 = vmatpush1.bf16.msra.mxu0 0
      %593 = vmatprep.subr.bf16.mxu0 0
      %594 = vmatpush1.bf16.msra.mxu0 0
      %595 = vmatprep.subr.bf16.mxu0 0
      %596 = vmatpush1.bf16.msra.mxu0 0
      %597 = vmatprep.subr.bf16.mxu0 0
      %598 = vmatpush1.bf16.msra.mxu0 0
      %599 = vmatprep.subr.bf16.mxu0 0
      %600 = vmatpush1.bf16.msra.mxu0 0
      %601 = vmatprep.subr.bf16.mxu0 0
      %602 = vmatpush1.bf16.msra.mxu0 0
      %603 = vmatprep.subr.bf16.mxu0 0
      %604 = vmatpush1.bf16.msra.mxu0 0
      %605 = vmatprep.subr.bf16.mxu0 0
      %606 = vmatpush1.bf16.msra.mxu0 %v565
      %607 = vmatprep.subr.bf16.mxu0 0
      %608 = vmatpush2.bf16.msra.mxu0 0
      %609 = vmatprep.subr.bf16.mxu0 0
      %610 = vmatpush2.bf16.msra.mxu0 0
      %611 = vmatprep.subr.bf16.mxu0 0
      %612 = vmatpush2.bf16.msra.mxu0 0
      %613 = vmatprep.subr.bf16.mxu0 0
      %614 = vmatpush2.bf16.msra.mxu0 0
      %615 = vmatprep.subr.bf16.mxu0 0
      %616 = vmatpush2.bf16.msra.mxu0 0
      %617 = vmatprep.subr.bf16.mxu0 0
      %618 = vmatpush2.bf16.msra.mxu0 0
      %619 = vmatprep.subr.bf16.mxu0 0
      %620 = vmatpush2.bf16.msra.mxu0 0
      %621 = vmatprep.subr.bf16.mxu0 0
      %622 = vmatpush2.bf16.msra.mxu0 0
      %623 = vmatprep.mubr.bf16.mxu0 0
      %624 = vmatmul.mubr.bf16.gmra.mxu0 %v568
      %v625 = vpop.f32.mrf.mxu0
      %v626 = vadd.f32 %v499, %v625
      %v627 = vpop.f32.mrf.mxu0
      %v628 = vpop.f32.mrf.mxu0
      %v629 = vadd.f32 %v502, %v628
      %v630 = vpop.f32.mrf.mxu0
      %631 = vmatprep.mubr.bf16.mxu0 0
      %632 = vmatmul.mubr.bf16.gmra.mxu0 %v571
      %v633 = vpop.f32.mrf.mxu0
      %v634 = vadd.f32 %v507, %v633
      %v635 = vpop.f32.mrf.mxu0
      %v636 = vpop.f32.mrf.mxu0
      %v637 = vadd.f32 %v510, %v636
      %v638 = vpop.f32.mrf.mxu0
      %639 = vmatprep.mubr.bf16.mxu0 0
      %640 = vmatmul.mubr.bf16.gmra.mxu0 %v574
      %v641 = vpop.f32.mrf.mxu0
      %v642 = vadd.f32 %v515, %v641
      %v643 = vpop.f32.mrf.mxu0
      %v644 = vpop.f32.mrf.mxu0
      %v645 = vadd.f32 %v518, %v644
      %v646 = vpop.f32.mrf.mxu0
      %647 = vmatprep.mubr.bf16.mxu0 0
      %648 = vmatmul.mubr.bf16.gmra.mxu0 %v577
      %v649 = vpop.f32.mrf.mxu0
      %v650 = vadd.f32 %v523, %v649
      %v651 = vpop.f32.mrf.mxu0
      %v652 = vpop.f32.mrf.mxu0
      %v653 = vadd.f32 %v526, %v652
      %v654 = vpop.f32.mrf.mxu0
      %655 = vmatprep.mubr.bf16.mxu0 0
      %656 = vmatmul.mubr.bf16.gmra.mxu0 %v580
      %v657 = vpop.f32.mrf.mxu0
      %v658 = vadd.f32 %v531, %v657
      %v659 = vpop.f32.mrf.mxu0
      %v660 = vpop.f32.mrf.mxu0
      %v661 = vadd.f32 %v534, %v660
      %v662 = vpop.f32.mrf.mxu0
      %663 = vmatprep.mubr.bf16.mxu0 0
      %664 = vmatmul.mubr.bf16.gmra.mxu0 %v583
      %v665 = vpop.f32.mrf.mxu0
      %v666 = vadd.f32 %v539, %v665
      %v667 = vpop.f32.mrf.mxu0
      %v668 = vpop.f32.mrf.mxu0
      %v669 = vadd.f32 %v542, %v668
      %v670 = vpop.f32.mrf.mxu0
      %671 = vmatprep.mubr.bf16.mxu0 0
      %672 = vmatmul.mubr.bf16.gmra.mxu0 %v586
      %v673 = vpop.f32.mrf.mxu0
      %v674 = vadd.f32 %v547, %v673
      %v675 = vpop.f32.mrf.mxu0
      %v676 = vpop.f32.mrf.mxu0
      %v677 = vadd.f32 %v550, %v676
      %v678 = vpop.f32.mrf.mxu0
      %679 = vmatprep.mubr.bf16.mxu0 0
      %680 = vmatmul.mubr.bf16.gmra.mxu0 %v589
      %v681 = vpop.f32.mrf.mxu0
      %v682 = vadd.f32 %v555, %v681
      %v683 = vpop.f32.mrf.mxu0
      %v684 = vpop.f32.mrf.mxu0
      %v685 = vadd.f32 %v558, %v684
      %v686 = vpop.f32.mrf.mxu0
      %687 = vdwg.mxu0
      %v688 = vld [vmem:[%s372] sm:$0xff]
      %v689 = vld [vmem:[%s372 + $0x8] sm:$0xff]
      %v690 = vld [vmem:[%s372 + $0x10] sm:$0xff]
      %v691 = vld [vmem:[%s372 + $0x18] sm:$0xff]
      %v692 = vld [vmem:[%s372 + $0x20] sm:$0xff]
      %v693 = vld [vmem:[%s372 + $0x28] sm:$0xff]
      %v694 = vld [vmem:[%s372 + $0x30] sm:$0xff]
      %v695 = vld [vmem:[%s372 + $0x38] sm:$0xff]
      %v696 = vld [vmem:[%s372 + $0x40] sm:$0xff]
      %v697 = vld [vmem:[%s372 + $0x48] sm:$0xff]
      %v698 = vld [vmem:[%s372 + $0x50] sm:$0xff]
      %v699 = vld [vmem:[%s372 + $0x58] sm:$0xff]
      %v700 = vld [vmem:[%s372 + $0x60] sm:$0xff]
      %v701 = vld [vmem:[%s372 + $0x68] sm:$0xff]
      %v702 = vld [vmem:[%s372 + $0x70] sm:$0xff]
      %v703 = vld [vmem:[%s372 + $0x78] sm:$0xff]
      %v704 = vpack.c.bf16 %v689, %v688
      %v705 = vpack.c.bf16 %v691, %v690
      %v706 = vpack.c.bf16 %v693, %v692
      %v707 = vpack.c.bf16 %v695, %v694
      %v708 = vpack.c.bf16 %v697, %v696
      %v709 = vpack.c.bf16 %v699, %v698
      %v710 = vpack.c.bf16 %v701, %v700
      %v711 = vpack.c.bf16 %v703, %v702
      %v712 = vld [vmem:[%s2] sm:$0xf]
      %v713 = vld [vmem:[%s2 + $0x4] sm:$0xf]
      %v716 = vunpack.c.l.b16 %v712
      %v717 = vunpack.c.l.b16 %v713
      %v718 = vpack.c.b16 %v717, %v716
      %v721 = vsel %vm439, %v704, 0
      %v724 = vsel %vm439, %v705, 0
      %v727 = vsel %vm439, %v706, 0
      %v730 = vsel %vm439, %v707, 0
      %v733 = vsel %vm439, %v708, 0
      %v736 = vsel %vm439, %v709, 0
      %v739 = vsel %vm439, %v710, 0
      %v742 = vsel %vm439, %v711, 0
      %744 = vmatprep.subr.bf16.mxu0 0
      %745 = vmatpush1.bf16.msra.mxu0 0
      %746 = vmatprep.subr.bf16.mxu0 0
      %747 = vmatpush1.bf16.msra.mxu0 0
      %748 = vmatprep.subr.bf16.mxu0 0
      %749 = vmatpush1.bf16.msra.mxu0 0
      %750 = vmatprep.subr.bf16.mxu0 0
      %751 = vmatpush1.bf16.msra.mxu0 0
      %752 = vmatprep.subr.bf16.mxu0 0
      %753 = vmatpush1.bf16.msra.mxu0 0
      %754 = vmatprep.subr.bf16.mxu0 0
      %755 = vmatpush1.bf16.msra.mxu0 0
      %756 = vmatprep.subr.bf16.mxu0 0
      %757 = vmatpush1.bf16.msra.mxu0 0
      %758 = vmatprep.subr.bf16.mxu0 0
      %759 = vmatpush1.bf16.msra.mxu0 %v718
      %760 = vmatprep.subr.bf16.mxu0 0
      %761 = vmatpush2.bf16.msra.mxu0 0
      %762 = vmatprep.subr.bf16.mxu0 0
      %763 = vmatpush2.bf16.msra.mxu0 0
      %764 = vmatprep.subr.bf16.mxu0 0
      %765 = vmatpush2.bf16.msra.mxu0 0
      %766 = vmatprep.subr.bf16.mxu0 0
      %767 = vmatpush2.bf16.msra.mxu0 0
      %768 = vmatprep.subr.bf16.mxu0 0
      %769 = vmatpush2.bf16.msra.mxu0 0
      %770 = vmatprep.subr.bf16.mxu0 0
      %771 = vmatpush2.bf16.msra.mxu0 0
      %772 = vmatprep.subr.bf16.mxu0 0
      %773 = vmatpush2.bf16.msra.mxu0 0
      %774 = vmatprep.subr.bf16.mxu0 0
      %775 = vmatpush2.bf16.msra.mxu0 0
      %776 = vmatprep.mubr.bf16.mxu0 0
      %777 = vmatmul.mubr.bf16.gmra.mxu0 %v721
      %v778 = vpop.f32.mrf.mxu0
      %v779 = vadd.f32 0.0, %v778
      %v780 = vpop.f32.mrf.mxu0
      %v781 = vpop.f32.mrf.mxu0
      %v782 = vadd.f32 0.0, %v781
      %v783 = vpop.f32.mrf.mxu0
      %784 = vmatprep.mubr.bf16.mxu0 0
      %785 = vmatmul.mubr.bf16.gmra.mxu0 %v724
      %v786 = vpop.f32.mrf.mxu0
      %v787 = vadd.f32 0.0, %v786
      %v788 = vpop.f32.mrf.mxu0
      %v789 = vpop.f32.mrf.mxu0
      %v790 = vadd.f32 0.0, %v789
      %v791 = vpop.f32.mrf.mxu0
      %792 = vmatprep.mubr.bf16.mxu0 0
      %793 = vmatmul.mubr.bf16.gmra.mxu0 %v727
      %v794 = vpop.f32.mrf.mxu0
      %v795 = vadd.f32 0.0, %v794
      %v796 = vpop.f32.mrf.mxu0
      %v797 = vpop.f32.mrf.mxu0
      %v798 = vadd.f32 0.0, %v797
      %v799 = vpop.f32.mrf.mxu0
      %800 = vmatprep.mubr.bf16.mxu0 0
      %801 = vmatmul.mubr.bf16.gmra.mxu0 %v730
      %v802 = vpop.f32.mrf.mxu0
      %v803 = vadd.f32 0.0, %v802
      %v804 = vpop.f32.mrf.mxu0
      %v805 = vpop.f32.mrf.mxu0
      %v806 = vadd.f32 0.0, %v805
      %v807 = vpop.f32.mrf.mxu0
      %808 = vmatprep.mubr.bf16.mxu0 0
      %809 = vmatmul.mubr.bf16.gmra.mxu0 %v733
      %v810 = vpop.f32.mrf.mxu0
      %v811 = vadd.f32 0.0, %v810
      %v812 = vpop.f32.mrf.mxu0
      %v813 = vpop.f32.mrf.mxu0
      %v814 = vadd.f32 0.0, %v813
      %v815 = vpop.f32.mrf.mxu0
      %816 = vmatprep.mubr.bf16.mxu0 0
      %817 = vmatmul.mubr.bf16.gmra.mxu0 %v736
      %v818 = vpop.f32.mrf.mxu0
      %v819 = vadd.f32 0.0, %v818
      %v820 = vpop.f32.mrf.mxu0
      %v821 = vpop.f32.mrf.mxu0
      %v822 = vadd.f32 0.0, %v821
      %v823 = vpop.f32.mrf.mxu0
      %824 = vmatprep.mubr.bf16.mxu0 0
      %825 = vmatmul.mubr.bf16.gmra.mxu0 %v739
      %v826 = vpop.f32.mrf.mxu0
      %v827 = vadd.f32 0.0, %v826
      %v828 = vpop.f32.mrf.mxu0
      %v829 = vpop.f32.mrf.mxu0
      %v830 = vadd.f32 0.0, %v829
      %v831 = vpop.f32.mrf.mxu0
      %832 = vmatprep.mubr.bf16.mxu0 0
      %833 = vmatmul.mubr.bf16.gmra.mxu0 %v742
      %v834 = vpop.f32.mrf.mxu0
      %v835 = vadd.f32 0.0, %v834
      %v836 = vpop.f32.mrf.mxu0
      %v837 = vpop.f32.mrf.mxu0
      %v838 = vadd.f32 0.0, %v837
      %v839 = vpop.f32.mrf.mxu0
      %840 = vdwg.mxu0
      %v841 = vadd.f32 %v626, %v779
      %v842 = vadd.f32 %v629, %v782
      %v843 = vadd.f32 %v634, %v787
      %v844 = vadd.f32 %v637, %v790
      %v845 = vadd.f32 %v642, %v795
      %v846 = vadd.f32 %v645, %v798
      %v847 = vadd.f32 %v650, %v803
      %v848 = vadd.f32 %v653, %v806
      %v849 = vadd.f32 %v658, %v811
      %v850 = vadd.f32 %v661, %v814
      %v851 = vadd.f32 %v666, %v819
      %v852 = vadd.f32 %v669, %v822
      %v853 = vadd.f32 %v674, %v827
      %v854 = vadd.f32 %v677, %v830
      %v855 = vadd.f32 %v682, %v835
      %v856 = vadd.f32 %v685, %v838
      %v857 = vld [vmem:[%s3] sm:$0x1]
      %v859 = vlaneseq
      %v860 = vshrl.u32 %v859, 7
      %v861 = vsub.s32 0, %v860
      %v862 = vrot.slane %v857, %v861
      %v864 = vadd.f32 %v841, %v862
      %v865 = vadd.f32 %v842, %v862
      %v866 = vadd.f32 %v843, %v862
      %v867 = vadd.f32 %v844, %v862
      %v868 = vadd.f32 %v845, %v862
      %v869 = vadd.f32 %v846, %v862
      %v870 = vadd.f32 %v847, %v862
      %v871 = vadd.f32 %v848, %v862
      %v872 = vadd.f32 %v849, %v862
      %v873 = vadd.f32 %v850, %v862
      %v874 = vadd.f32 %v851, %v862
      %v875 = vadd.f32 %v852, %v862
      %v876 = vadd.f32 %v853, %v862
      %v877 = vadd.f32 %v854, %v862
      %v878 = vadd.f32 %v855, %v862
      %v879 = vadd.f32 %v856, %v862
      %v880 = vmax.f32 %v864, 0.0
      %v881 = vmax.f32 %v865, 0.0
      %v882 = vmax.f32 %v866, 0.0
      %v883 = vmax.f32 %v867, 0.0
      %v884 = vmax.f32 %v868, 0.0
      %v885 = vmax.f32 %v869, 0.0
      %v886 = vmax.f32 %v870, 0.0
      %v887 = vmax.f32 %v871, 0.0
      %v888 = vmax.f32 %v872, 0.0
      %v889 = vmax.f32 %v873, 0.0
      %v890 = vmax.f32 %v874, 0.0
      %v891 = vmax.f32 %v875, 0.0
      %v892 = vmax.f32 %v876, 0.0
      %v893 = vmax.f32 %v877, 0.0
      %v894 = vmax.f32 %v878, 0.0
      %v895 = vmax.f32 %v879, 0.0
      %v896 = vpack.c.bf16 %v881, %v880
      %v897 = vpack.c.bf16 %v883, %v882
      %v898 = vpack.c.bf16 %v885, %v884
      %v899 = vpack.c.bf16 %v887, %v886
      %v900 = vpack.c.bf16 %v889, %v888
      %v901 = vpack.c.bf16 %v891, %v890
      %v902 = vpack.c.bf16 %v893, %v892
      %v903 = vpack.c.bf16 %v895, %v894
      %v904 = vld [vmem:[%s4] sm:$0xf]
      %v905 = vld [vmem:[%s4 + $0x4] sm:$0xf]
      %v906 = vld [vmem:[%s4 + $0x8] sm:$0xf]
      %v907 = vld [vmem:[%s4 + $0xc] sm:$0xf]
      %v908 = vld [vmem:[%s4 + $0x10] sm:$0xf]
      %v909 = vld [vmem:[%s4 + $0x14] sm:$0xf]
      %v910 = vld [vmem:[%s4 + $0x18] sm:$0xf]
      %v911 = vld [vmem:[%s4 + $0x1c] sm:$0xf]
      %v912 = vld [vmem:[%s4 + $0x20] sm:$0xf]
      %v913 = vld [vmem:[%s4 + $0x24] sm:$0xf]
      %v914 = vld [vmem:[%s4 + $0x28] sm:$0xf]
      %v915 = vld [vmem:[%s4 + $0x2c] sm:$0xf]
      %v916 = vld [vmem:[%s4 + $0x30] sm:$0xf]
      %v917 = vld [vmem:[%s4 + $0x34] sm:$0xf]
      %v918 = vld [vmem:[%s4 + $0x38] sm:$0xf]
      %v919 = vld [vmem:[%s4 + $0x3c] sm:$0xf]
      %v920 = vld [vmem:[%s5] sm:$0x1]
      %v922 = vlaneseq
      %v923 = vshrl.u32 %v922, 7
      %v924 = vsub.s32 0, %v923
      %v925 = vrot.slane %v920, %v924
      %v943 = vunpack.c.l.b16 %v904
      %v944 = vunpack.c.l.b16 %v905
      %v945 = vunpack.c.l.b16 %v906
      %v946 = vunpack.c.l.b16 %v907
      %v947 = vunpack.c.l.b16 %v908
      %v948 = vunpack.c.l.b16 %v909
      %v949 = vunpack.c.l.b16 %v910
      %v950 = vunpack.c.l.b16 %v911
      %v951 = vunpack.c.l.b16 %v912
      %v952 = vunpack.c.l.b16 %v913
      %v953 = vunpack.c.l.b16 %v914
      %v954 = vunpack.c.l.b16 %v915
      %v955 = vunpack.c.l.b16 %v916
      %v956 = vunpack.c.l.b16 %v917
      %v957 = vunpack.c.l.b16 %v918
      %v958 = vunpack.c.l.b16 %v919
      %v959 = vpack.c.b16 %v944, %v943
      %v960 = vpack.c.b16 %v946, %v945
      %v961 = vpack.c.b16 %v948, %v947
      %v962 = vpack.c.b16 %v950, %v949
      %v963 = vpack.c.b16 %v952, %v951
      %v964 = vpack.c.b16 %v954, %v953
      %v965 = vpack.c.b16 %v956, %v955
      %v966 = vpack.c.b16 %v958, %v957
      %975 = vmatprep.subr.bf16.mxu0 0
      %976 = vmatpush1.bf16.msra.mxu0 %v966
      %977 = vmatprep.subr.bf16.mxu0 0
      %978 = vmatpush1.bf16.msra.mxu0 %v965
      %979 = vmatprep.subr.bf16.mxu0 0
      %980 = vmatpush1.bf16.msra.mxu0 %v964
      %981 = vmatprep.subr.bf16.mxu0 0
      %982 = vmatpush1.bf16.msra.mxu0 %v963
      %983 = vmatprep.subr.bf16.mxu0 0
      %984 = vmatpush1.bf16.msra.mxu0 %v962
      %985 = vmatprep.subr.bf16.mxu0 0
      %986 = vmatpush1.bf16.msra.mxu0 %v961
      %987 = vmatprep.subr.bf16.mxu0 0
      %988 = vmatpush1.bf16.msra.mxu0 %v960
      %989 = vmatprep.subr.bf16.mxu0 0
      %990 = vmatpush1.bf16.msra.mxu0 %v959
      %991 = vmatprep.subr.bf16.mxu0 0
      %992 = vmatpush2.bf16.msra.mxu0 0
      %993 = vmatprep.subr.bf16.mxu0 0
      %994 = vmatpush2.bf16.msra.mxu0 0
      %995 = vmatprep.subr.bf16.mxu0 0
      %996 = vmatpush2.bf16.msra.mxu0 0
      %997 = vmatprep.subr.bf16.mxu0 0
      %998 = vmatpush2.bf16.msra.mxu0 0
      %999 = vmatprep.subr.bf16.mxu0 0
      %1000 = vmatpush2.bf16.msra.mxu0 0
      %1001 = vmatprep.subr.bf16.mxu0 0
      %1002 = vmatpush2.bf16.msra.mxu0 0
      %1003 = vmatprep.subr.bf16.mxu0 0
      %1004 = vmatpush2.bf16.msra.mxu0 0
      %1005 = vmatprep.subr.bf16.mxu0 0
      %1006 = vmatpush2.bf16.msra.mxu0 0
      %1007 = vmatprep.mubr.bf16.mxu0 0
      %1008 = vmatmul.mubr.bf16.gmra.mxu0 %v896
      %v1009 = vpop.f32.mrf.mxu0
      %v1010 = vadd.f32 %v925, %v1009
      %v1011 = vpop.f32.mrf.mxu0
      %v1012 = vpop.f32.mrf.mxu0
      %v1013 = vadd.f32 %v925, %v1012
      %v1014 = vpop.f32.mrf.mxu0
      %1015 = vmatprep.mubr.bf16.mxu0 0
      %1016 = vmatmul.mubr.bf16.gmra.mxu0 %v897
      %v1017 = vpop.f32.mrf.mxu0
      %v1018 = vadd.f32 %v925, %v1017
      %v1019 = vpop.f32.mrf.mxu0
      %v1020 = vpop.f32.mrf.mxu0
      %v1021 = vadd.f32 %v925, %v1020
      %v1022 = vpop.f32.mrf.mxu0
      %1023 = vmatprep.mubr.bf16.mxu0 0
      %1024 = vmatmul.mubr.bf16.gmra.mxu0 %v898
      %v1025 = vpop.f32.mrf.mxu0
      %v1026 = vadd.f32 %v925, %v1025
      %v1027 = vpop.f32.mrf.mxu0
      %v1028 = vpop.f32.mrf.mxu0
      %v1029 = vadd.f32 %v925, %v1028
      %v1030 = vpop.f32.mrf.mxu0
      %1031 = vmatprep.mubr.bf16.mxu0 0
      %1032 = vmatmul.mubr.bf16.gmra.mxu0 %v899
      %v1033 = vpop.f32.mrf.mxu0
      %v1034 = vadd.f32 %v925, %v1033
      %v1035 = vpop.f32.mrf.mxu0
      %v1036 = vpop.f32.mrf.mxu0
      %v1037 = vadd.f32 %v925, %v1036
      %v1038 = vpop.f32.mrf.mxu0
      %1039 = vmatprep.mubr.bf16.mxu0 0
      %1040 = vmatmul.mubr.bf16.gmra.mxu0 %v900
      %v1041 = vpop.f32.mrf.mxu0
      %v1042 = vadd.f32 %v925, %v1041
      %v1043 = vpop.f32.mrf.mxu0
      %v1044 = vpop.f32.mrf.mxu0
      %v1045 = vadd.f32 %v925, %v1044
      %v1046 = vpop.f32.mrf.mxu0
      %1047 = vmatprep.mubr.bf16.mxu0 0
      %1048 = vmatmul.mubr.bf16.gmra.mxu0 %v901
      %v1049 = vpop.f32.mrf.mxu0
      %v1050 = vadd.f32 %v925, %v1049
      %v1051 = vpop.f32.mrf.mxu0
      %v1052 = vpop.f32.mrf.mxu0
      %v1053 = vadd.f32 %v925, %v1052
      %v1054 = vpop.f32.mrf.mxu0
      %1055 = vmatprep.mubr.bf16.mxu0 0
      %1056 = vmatmul.mubr.bf16.gmra.mxu0 %v902
      %v1057 = vpop.f32.mrf.mxu0
      %v1058 = vadd.f32 %v925, %v1057
      %v1059 = vpop.f32.mrf.mxu0
      %v1060 = vpop.f32.mrf.mxu0
      %v1061 = vadd.f32 %v925, %v1060
      %v1062 = vpop.f32.mrf.mxu0
      %1063 = vmatprep.mubr.bf16.mxu0 0
      %1064 = vmatmul.mubr.bf16.gmra.mxu0 %v903
      %v1065 = vpop.f32.mrf.mxu0
      %v1066 = vadd.f32 %v925, %v1065
      %v1067 = vpop.f32.mrf.mxu0
      %v1068 = vpop.f32.mrf.mxu0
      %v1069 = vadd.f32 %v925, %v1068
      %v1070 = vpop.f32.mrf.mxu0
      %1071 = vdwg.mxu0
      %1072 = vst [vmem:[%s378] sm:$0xff] %v1010
      %1073 = vst [vmem:[%s378 + $0x8] sm:$0xff] %v1013
      %1074 = vst [vmem:[%s378 + $0x10] sm:$0xff] %v1018
      %1075 = vst [vmem:[%s378 + $0x18] sm:$0xff] %v1021
      %1076 = vst [vmem:[%s378 + $0x20] sm:$0xff] %v1026
      %1077 = vst [vmem:[%s378 + $0x28] sm:$0xff] %v1029
      %1078 = vst [vmem:[%s378 + $0x30] sm:$0xff] %v1034
      %1079 = vst [vmem:[%s378 + $0x38] sm:$0xff] %v1037
      %1080 = vst [vmem:[%s378 + $0x40] sm:$0xff] %v1042
      %1081 = vst [vmem:[%s378 + $0x48] sm:$0xff] %v1045
      %1082 = vst [vmem:[%s378 + $0x50] sm:$0xff] %v1050
      %1083 = vst [vmem:[%s378 + $0x58] sm:$0xff] %v1053
      %1084 = vst [vmem:[%s378 + $0x60] sm:$0xff] %v1058
      %1085 = vst [vmem:[%s378 + $0x68] sm:$0xff] %v1061
      %1086 = vst [vmem:[%s378 + $0x70] sm:$0xff] %v1066
      %1087 = vst [vmem:[%s378 + $0x78] sm:$0xff] %v1069
      %s1088 = smul.u32 16, %s20
      %p1089 = scmp.lt.s32.totalorder %s1088, 31
      %s1090 = scalar_select %p1089, %s1088, 31
      %s1091 = smul.addr %s1090, 8
      %s1092 = scalar_lea.vmem %s9, %s1091
      // Predicated region
      $region57: #{multimodal_forward.1} parent=55 // pred_check
        %p1093 = pneg %p242
      $region58: #{multimodal_forward.1} parent=55 // pred_check_branch
        %1095 = sbr.rel (%p1093) target = $region60
      $region59: #{multimodal_forward.1} parent=55 // pred_region
        %s1096 = smul.u32 16, %s20
      $region60: #{multimodal_forward.1} parent=55 // pred_fallthru
        _
    $region56: #{multimodal_forward.1} parent=5 // pred_fallthru
      _
    %p1097 = scmp.le.s32.totalorder 2, %s15
    // Predicated region
    $region61: #{multimodal_forward.1} parent=5 // pred_check
      %p1098 = pneg %p1097
    $region62: #{multimodal_forward.1} parent=5 // pred_check_branch
      %1100 = sbr.rel (%p1098) target = $region64
    $region63: #{multimodal_forward.1} parent=5 // pred_region
      %s1101 = ssub.s32 %s15, 2
      // Predicated region
      $region65: #{multimodal_forward.1} parent=63 // pred_check
        %p1102 = pneg %p248
      $region66: #{multimodal_forward.1} parent=63 // pred_check_branch
        %1104 = sbr.rel (%p1102) target = $region68
      $region67: #{multimodal_forward.1} parent=63 // pred_region
        %s1105 = smul.u32 16, %s21
        %p1106 = scmp.lt.s32.totalorder %s1105, 31
        %s1107 = scalar_select %p1106, %s1105, 31
        %s1108 = smul.addr %s1107, 8
        %s1109 = scalar_lea.vmem %s9, %s1108
      $region68: #{multimodal_forward.1} parent=63 // pred_fallthru
        _
    $region64: #{multimodal_forward.1} parent=5 // pred_fallthru
      _
  $region6: #{multimodal_forward.1} parent=0 // loop_footer
    %s19 = sadd.s32 1, %s15
  $region7: #{multimodal_forward.1} parent=0 // loop_footer_branch
    %14 = sbr.rel target = $region3
  $region8: #{multimodal_forward.1} parent=0 // loop_exit
    _

</llo_original>
